<compile_context>
chip_gen: v6e
topology: v6e:2x2x1
jax: 0.10.0
libtpu: 0.0.40
codegen_flags: <defaults>
</compile_context>

<pallas_src>
import functools
import math

import jax
import jax.numpy as jnp
import numpy as np
from jax.experimental import pallas as pl
from jax.experimental.pallas import tpu as pltpu

_BN_EPS = 1e-5     # torch.nn.BatchNorm1d default eps
_NORM_EPS = 1e-12  # torch.nn.functional.normalize default eps


def _pick_tile(n, cap):
    """Largest tile <= cap that exactly divides n and is a sublane multiple."""
    if n <= cap:
        return n
    for t in range(cap, 7, -1):
        if n % t == 0 and t % 8 == 0:
            return t
    return n  # fall back to a single (untiled) block


# ---------------------------------------------------------------------------
# pass 1: BatchNorm1d(cluster_size) batch statistics over all B*N rows
# ---------------------------------------------------------------------------
def _bn_stats_kernel(x_ref, cw_ref, mu_ref, rstd_ref, *, inv_n):
    # x_ref : (TR, D) bf16 row tile of x
    # cw_ref: (D, K)  bf16 cluster_weights
    # mu_ref, rstd_ref: (1, K) f32 resident outputs (used as sum/sumsq accs)
    i = pl.program_id(0)

    @pl.when(i == 0)
    def _():
        mu_ref[...] = jnp.zeros_like(mu_ref)
        rstd_ref[...] = jnp.zeros_like(rstd_ref)

    act = jnp.dot(x_ref[...], cw_ref[...],
                  preferred_element_type=jnp.float32)            # (TR, K)
    mu_ref[...] += jnp.sum(act, axis=0, keepdims=True)
    rstd_ref[...] += jnp.sum(act * act, axis=0, keepdims=True)

    @pl.when(i == pl.num_programs(0) - 1)
    def _():
        mu = mu_ref[...] * inv_n
        var = jnp.maximum(rstd_ref[...] * inv_n - mu * mu, 0.0)
        mu_ref[...] = mu
        rstd_ref[...] = jax.lax.rsqrt(var + _BN_EPS)


# ---------------------------------------------------------------------------
# pass 2: per-sample VLAD accumulation over N tiles (B parallel, N arbitrary)
# ---------------------------------------------------------------------------
def _vlad_kernel(x_ref, cw_ref, cw2_ref, mu_ref, rstd_ref, out_ref,
                 vlad_acc, asum_acc):
    # x_ref  : (1, TN, D) bf16   one N tile of sample b
    # cw_ref : (D, K) bf16       cluster_weights
    # cw2_ref: (D, K) f32        cluster_weights2[0]
    # mu_ref / rstd_ref: (1, K) f32 BN1 statistics from pass 1
    # out_ref: (1, D, K) bf16    normalized VLAD descriptor of sample b
    # vlad_acc: (D, K) f32, asum_acc: (1, K) f32  VMEM accumulators
    t = pl.program_id(1)

    @pl.when(t == 0)
    def _():
        vlad_acc[...] = jnp.zeros_like(vlad_acc)
        asum_acc[...] = jnp.zeros_like(asum_acc)

    x_t = x_ref[0]                                               # (TN, D)

    # soft assignment + BN1 (batch stats) + softmax over clusters (lane axis)
    act = jnp.dot(x_t, cw_ref[...],
                  preferred_element_type=jnp.float32)            # (TN, K)
    act = (act - mu_ref[...]) * rstd_ref[...]
    act = jnp.exp(act - jnp.max(act, axis=-1, keepdims=True))
    inv_den = pl.reciprocal(jnp.sum(act, axis=-1, keepdims=True), approx=False)
    act = act * inv_den                                          # (TN, K) f32

    asum_acc[...] += jnp.sum(act, axis=0, keepdims=True)
    act_bf = act.astype(jnp.bfloat16)      # single cast; ends the f32 range

    # vlad[d, k] += sum_n x[n, d] * act[n, k]  (contract N = axis 0 of both)
    vlad_acc[...] += jax.lax.dot_general(
        x_t, act_bf,
        dimension_numbers=(((0,), (0,)), ((), ())),
        preferred_element_type=jnp.float32)                      # (D, K)

    @pl.when(t == pl.num_programs(1) - 1)
    def _():
        vlad = vlad_acc[...] - asum_acc[...] * cw2_ref[...]      # (D, K)
        # intra-normalization over D and global L2 over the flattened (D*K)
        # descriptor fused into a single scale (global norm from column norms).
        col_sq = jnp.sum(vlad * vlad, axis=0, keepdims=True)     # (1, K)
        col_nrm = jnp.sqrt(col_sq)
        inv_col = 1.0 / jnp.maximum(col_nrm, _NORM_EPS)
        col_unit = col_nrm * inv_col
        tot_nrm = jnp.sqrt(jnp.sum(col_unit * col_unit, axis=1, keepdims=True))
        inv_tot = 1.0 / jnp.maximum(tot_nrm, _NORM_EPS)
        # one block store per sample (no per-d masked scatter)
        out_ref[0] = (vlad * (inv_col * inv_tot)).astype(out_ref.dtype)


# ---------------------------------------------------------------------------
# pass 3: hidden projection + BN + gating context
# ---------------------------------------------------------------------------
def _head_kernel(vflat_ref, hw_ref, gw_ref, out_ref):
    # vflat_ref: (B, D*K) bf16, hw_ref: (D*K, Op) bf16, gw_ref: (Op, Op) bf16
    hidden = jnp.dot(vflat_ref[...], hw_ref[...],
                     preferred_element_type=jnp.float32)         # (B, Op)
    mu = jnp.mean(hidden, axis=0, keepdims=True)
    var = jnp.mean(jnp.square(hidden - mu), axis=0, keepdims=True)
    hidden = (hidden - mu) * jax.lax.rsqrt(var + _BN_EPS)

    gates = jnp.dot(hidden.astype(jnp.bfloat16), gw_ref[...],
                    preferred_element_type=jnp.float32)          # (B, Op)
    mug = jnp.mean(gates, axis=0, keepdims=True)
    varg = jnp.mean(jnp.square(gates - mug), axis=0, keepdims=True)
    gates = (gates - mug) * jax.lax.rsqrt(varg + _BN_EPS)
    gates = 1.0 / (1.0 + jnp.exp(-gates))                        # sigmoid (EUP)

    out_ref[...] = (hidden * gates).astype(out_ref.dtype)


# ---------------------------------------------------------------------------
# wrapper
# ---------------------------------------------------------------------------
def netvlad_loupe_forward(x_nchw, params, *, max_samples, feature_size):
    cw = params["cluster_weights"]      # (D, K) f32
    cw2 = params["cluster_weights2"]    # (1, D, K) f32
    hw = params["hidden1_weights"]      # (D*K, O) f32, flat row index = d*K + k
    gw = params["gating_weights"]       # (O, O) f32
    D, K = cw.shape
    O = gw.shape[1]
    assert D == feature_size

    # matches x.transpose(1, 3).contiguous().view(-1, max_samples, feature_size)
    x_bnd = jnp.transpose(x_nchw, (0, 3, 2, 1)).reshape(-1, max_samples, D)
    B = x_bnd.shape[0]
    N = max_samples

    # single bf16 copy of x; the (B*N, D) row view for pass 1 is a free reshape
    x_bf = x_bnd.astype(jnp.bfloat16)
    x_rows = x_bf.reshape(B * N, D)
    cw_bf = cw.astype(jnp.bfloat16)
    cw2_dk = cw2[0]

    # pad output dim to a 128 multiple (lane-dense matmuls / output store);
    # padded columns are exact zeros and are sliced off below.
    O_pad = ((O + 127) // 128) * 128
    hw_bf = jnp.zeros((D * K, O_pad), jnp.bfloat16).at[:, :O].set(
        hw.astype(jnp.bfloat16))
    gw_bf = jnp.zeros((O_pad, O_pad), jnp.bfloat16).at[:O, :O].set(
        gw.astype(jnp.bfloat16))

    # ---- pass 1: BN1 batch statistics over all B*N rows ----
    TR = _pick_tile(B * N, 2048)
    mu, rstd = pl.pallas_call(
        functools.partial(_bn_stats_kernel, inv_n=1.0 / float(B * N)),
        out_shape=(jax.ShapeDtypeStruct((1, K), jnp.float32),
                   jax.ShapeDtypeStruct((1, K), jnp.float32)),
        grid=((B * N) // TR,),
        in_specs=[pl.BlockSpec((TR, D), lambda i: (i, 0)),
                  pl.BlockSpec((D, K), lambda i: (0, 0))],
        out_specs=(pl.BlockSpec((1, K), lambda i: (0, 0)),
                   pl.BlockSpec((1, K), lambda i: (0, 0))),
        compiler_params=pltpu.CompilerParams(
            dimension_semantics=("arbitrary",)),
    )(x_rows, cw_bf)

    # ---- pass 2: VLAD accumulation; B parallel (megacore), N tiled last ----
    TN = _pick_tile(N, 2048)
    vlad3 = pl.pallas_call(
        _vlad_kernel,
        out_shape=jax.ShapeDtypeStruct((B, D, K), jnp.bfloat16),
        grid=(B, N // TN),
        in_specs=[
            pl.BlockSpec((1, TN, D), lambda b, t: (b, t, 0)),
            pl.BlockSpec((D, K), lambda b, t: (0, 0)),
            pl.BlockSpec((D, K), lambda b, t: (0, 0)),
            pl.BlockSpec((1, K), lambda b, t: (0, 0)),
            pl.BlockSpec((1, K), lambda b, t: (0, 0)),
        ],
        out_specs=pl.BlockSpec((1, D, K), lambda b, t: (b, 0, 0)),
        scratch_shapes=[pltpu.VMEM((D, K), jnp.float32),
                        pltpu.VMEM((1, K), jnp.float32)],
        compiler_params=pltpu.CompilerParams(
            dimension_semantics=("parallel", "arbitrary")),
    )(x_bf, cw_bf, cw2_dk, mu, rstd)

    # (B, D, K) -> (B, D*K): free row-major reshape (PyTorch d*K + k order)
    vflat = vlad3.reshape(B, D * K)

    # ---- pass 3: hidden projection + BN + gating ----
    out = pl.pallas_call(
        _head_kernel,
        out_shape=jax.ShapeDtypeStruct((B, O_pad), jnp.float32),
        grid=(1,),
        in_specs=[pl.BlockSpec((B, D * K), lambda i: (0, 0)),
                  pl.BlockSpec((D * K, O_pad), lambda i: (0, 0)),
                  pl.BlockSpec((O_pad, O_pad), lambda i: (0, 0))],
        out_specs=pl.BlockSpec((B, O_pad), lambda i: (0, 0)),
        compiler_params=pltpu.CompilerParams(
            dimension_semantics=("arbitrary",)),
    )(vflat, hw_bf, gw_bf)
    return out[:, :O]


def netvlad_loupe_reference(x_nchw, params, *, max_samples, feature_size):
    """Pure-JAX mirror of the PyTorch forward (training-mode BN, identity
    affine) using the same bf16 operand policy as the kernels for the matmuls
    so the comparison is like-for-like."""
    cw = params["cluster_weights"]
    cw2 = params["cluster_weights2"]
    hw = params["hidden1_weights"]
    gw = params["gating_weights"]
    D = feature_size
    K = cw.shape[1]

    x = jnp.transpose(x_nchw, (0, 3, 2, 1)).reshape(-1, max_samples, D)
    x_bf = x.astype(jnp.bfloat16)
    act = jnp.einsum("bnd,dk->bnk", x_bf, cw.astype(jnp.bfloat16),
                     preferred_element_type=jnp.float32)          # (B, N, K)
    a2 = act.reshape(-1, K)
    mu = a2.mean(axis=0)
    var = ((a2 - mu) ** 2).mean(axis=0)
    a2 = (a2 - mu) / jnp.sqrt(var + _BN_EPS)
    a2 = a2.reshape(-1, max_samples, K)
    e = jnp.exp(a2 - jnp.max(a2, axis=-1, keepdims=True))
    act = e * (1.0 / jnp.sum(e, axis=-1, keepdims=True))
    a_sum = act.sum(axis=-2, keepdims=True)                       # (B, 1, K)
    a = a_sum * cw2                                               # (B, D, K)
    vlad = jnp.einsum("bnd,bnk->bdk", x_bf, act.astype(jnp.bfloat16),
                      preferred_element_type=jnp.float32)         # (B, D, K)
    vlad = vlad - a
    vlad = vlad / jnp.maximum(
        jnp.sqrt(jnp.sum(vlad * vlad, axis=1, keepdims=True)), _NORM_EPS)
    vlad = vlad.reshape(-1, D * K)
    vlad = vlad / jnp.maximum(
        jnp.sqrt(jnp.sum(vlad * vlad, axis=1, keepdims=True)), _NORM_EPS)
    vlad_bf = vlad.astype(jnp.bfloat16)
    hidden = jnp.matmul(vlad_bf, hw.astype(jnp.bfloat16),
                        preferred_element_type=jnp.float32)       # (B, O)
    mu2 = hidden.mean(axis=0)
    var2 = ((hidden - mu2) ** 2).mean(axis=0)
    hidden = (hidden - mu2) / jnp.sqrt(var2 + _BN_EPS)
    gates = jnp.matmul(hidden.astype(jnp.bfloat16), gw.astype(jnp.bfloat16),
                       preferred_element_type=jnp.float32)
    mug = gates.mean(axis=0)
    varg = ((gates - mug) ** 2).mean(axis=0)
    gates = (gates - mug) / jnp.sqrt(varg + _BN_EPS)
    gates = jax.nn.sigmoid(gates)
    return hidden * gates


if __name__ == "__main__":
    B = 4
    feature_size = 16
    max_samples = 32
    cluster_size = 8
    output_dim = 32

    key = jax.random.PRNGKey(0)
    kcw, kcw2, khw, kgw, kx = jax.random.split(key, 5)
    params = {
        "cluster_weights": jax.random.normal(
            kcw, (feature_size, cluster_size), jnp.float32) / math.sqrt(feature_size),
        "cluster_weights2": jax.random.normal(
            kcw2, (1, feature_size, cluster_size), jnp.float32) / math.sqrt(feature_size),
        "hidden1_weights": jax.random.normal(
            khw, (cluster_size * feature_size, output_dim), jnp.float32) / math.sqrt(feature_size),
        "gating_weights": jax.random.normal(
            kgw, (output_dim, output_dim), jnp.float32) / math.sqrt(output_dim),
    }
    # NCHW input, same convention the PyTorch module expects:
    # (batch, feature_size, max_samples, 1)
    x = jax.random.normal(kx, (B, feature_size, max_samples, 1), jnp.float32)

    out = netvlad_loupe_forward(
        x, params, max_samples=max_samples, feature_size=feature_size)
    out = jax.block_until_ready(out)

    ref = netvlad_loupe_reference(
        x, params, max_samples=max_samples, feature_size=feature_size)
    np.testing.assert_allclose(np.asarray(out), np.asarray(ref),
                               rtol=5e-3, atol=5e-3)
    print("KERNEL_OK")
</pallas_src>

<mosaic_0001>
module attributes {stable_mosaic.version = 11 : i64} {
  func.func @_bn_stats_kernel(%arg0: i32, %arg1: memref<128x16xbf16, #tpu.memory_space<vmem>>, %arg2: memref<16x8xbf16, #tpu.memory_space<vmem>>, %arg3: memref<1x8xf32, #tpu.memory_space<vmem>>, %arg4: memref<1x8xf32, #tpu.memory_space<vmem>>) attributes {dimension_semantics = [#tpu.dimension_semantics<arbitrary>], iteration_bounds = array<i64: 1>, scalar_prefetch = 0 : i64, scratch_operands = 0 : i64, tpu.core_type = #tpu.core_type<tc>, window_params = [{transform_indices = @transform_0, window_bounds = array<i64: 128, 16>}, {pipeline_mode = #tpu.pipeline_mode<synchronous>, transform_indices = @transform_1, window_bounds = array<i64: 16, 8>}, {pipeline_mode = #tpu.pipeline_mode<synchronous>, transform_indices = @transform_2, window_bounds = array<i64: 1, 8>}, {pipeline_mode = #tpu.pipeline_mode<synchronous>, transform_indices = @transform_3, window_bounds = array<i64: 1, 8>}]} {
    %c0_i32 = arith.constant 0 : i32
    %0 = arith.cmpi eq, %arg0, %c0_i32 : i32
    %1 = arith.extui %0 : i1 to i32
    %c0_i32_0 = arith.constant 0 : i32
    %2 = arith.cmpi ne, %1, %c0_i32_0 : i32
    scf.if %2 {
      %cst_16 = arith.constant 0.000000e+00 : f32
      %20 = vector.broadcast %cst_16 : f32 to vector<1x8xf32>
      %c0_17 = arith.constant 0 : index
      %c0_18 = arith.constant 0 : index
      %21 = vector.load %arg3[%c0_17, %c0_18] : memref<1x8xf32, #tpu.memory_space<vmem>>, vector<1x8xf32>
      tpu.vector_store %arg3[%c0_17, %c0_18], %20 {strides = array<i32>} : memref<1x8xf32, #tpu.memory_space<vmem>>, vector<1x8xf32>,
      %cst_19 = arith.constant 0.000000e+00 : f32
      %22 = vector.broadcast %cst_19 : f32 to vector<1x8xf32>
      %c0_20 = arith.constant 0 : index
      %c0_21 = arith.constant 0 : index
      %23 = vector.load %arg4[%c0_20, %c0_21] : memref<1x8xf32, #tpu.memory_space<vmem>>, vector<1x8xf32>
      tpu.vector_store %arg4[%c0_20, %c0_21], %22 {strides = array<i32>} : memref<1x8xf32, #tpu.memory_space<vmem>>, vector<1x8xf32>,
    } else {
    }
    %c0 = arith.constant 0 : index
    %c0_1 = arith.constant 0 : index
    %3 = vector.load %arg1[%c0, %c0_1] : memref<128x16xbf16, #tpu.memory_space<vmem>>, vector<128x16xbf16>
    %c0_2 = arith.constant 0 : index
    %c0_3 = arith.constant 0 : index
    %4 = vector.load %arg2[%c0_2, %c0_3] : memref<16x8xbf16, #tpu.memory_space<vmem>>, vector<16x8xbf16>
    %cst = arith.constant dense<0.000000e+00> : vector<128x8xf32>
    %5 = tpu.matmul %3, %4, %cst {dimension_numbers = #tpu.dot_dimension_numbers<[1], [0], [0], [1], [0, 0, 1, 1], [], []>} : vector<128x16xbf16>, vector<16x8xbf16>, vector<128x8xf32> -> vector<128x8xf32>
    %c0_4 = arith.constant 0 : index
    %c0_5 = arith.constant 0 : index
    %6 = vector.load %arg3[%c0_4, %c0_5] : memref<1x8xf32, #tpu.memory_space<vmem>>, vector<1x8xf32>
    %cst_6 = arith.constant dense<0.000000e+00> : vector<8xf32>
    %7 = vector.multi_reduction <add>, %5, %cst_6 [0] : vector<128x8xf32> to vector<8xf32>
    %8 = vector.shape_cast %7 : vector<8xf32> to vector<1x8xf32>
    %9 = arith.addf %6, %8 : vector<1x8xf32>
    %c0_7 = arith.constant 0 : index
    %c0_8 = arith.constant 0 : index
    %10 = vector.load %arg3[%c0_7, %c0_8] : memref<1x8xf32, #tpu.memory_space<vmem>>, vector<1x8xf32>
    tpu.vector_store %arg3[%c0_7, %c0_8], %9 {strides = array<i32>} : memref<1x8xf32, #tpu.memory_space<vmem>>, vector<1x8xf32>,
    %c0_9 = arith.constant 0 : index
    %c0_10 = arith.constant 0 : index
    %11 = vector.load %arg4[%c0_9, %c0_10] : memref<1x8xf32, #tpu.memory_space<vmem>>, vector<1x8xf32>
    %12 = arith.mulf %5, %5 : vector<128x8xf32>
    %cst_11 = arith.constant dense<0.000000e+00> : vector<8xf32>
    %13 = vector.multi_reduction <add>, %12, %cst_11 [0] : vector<128x8xf32> to vector<8xf32>
    %14 = vector.shape_cast %13 : vector<8xf32> to vector<1x8xf32>
    %15 = arith.addf %11, %14 : vector<1x8xf32>
    %c0_12 = arith.constant 0 : index
    %c0_13 = arith.constant 0 : index
    %16 = vector.load %arg4[%c0_12, %c0_13] : memref<1x8xf32, #tpu.memory_space<vmem>>, vector<1x8xf32>
    tpu.vector_store %arg4[%c0_12, %c0_13], %15 {strides = array<i32>} : memref<1x8xf32, #tpu.memory_space<vmem>>, vector<1x8xf32>,
    %c0_i32_14 = arith.constant 0 : i32
    %17 = arith.cmpi eq, %arg0, %c0_i32_14 : i32
    %18 = arith.extui %17 : i1 to i32
    %c0_i32_15 = arith.constant 0 : i32
    %19 = arith.cmpi ne, %18, %c0_i32_15 : i32
    scf.if %19 {
      %c0_16 = arith.constant 0 : index
      %c0_17 = arith.constant 0 : index
      %20 = vector.load %arg3[%c0_16, %c0_17] : memref<1x8xf32, #tpu.memory_space<vmem>>, vector<1x8xf32>
      %cst_18 = arith.constant 7.812500e-03 : f32
      %21 = vector.broadcast %cst_18 : f32 to vector<1x8xf32>
      %22 = arith.mulf %20, %21 : vector<1x8xf32>
      %c0_19 = arith.constant 0 : index
      %c0_20 = arith.constant 0 : index
      %23 = vector.load %arg4[%c0_19, %c0_20] : memref<1x8xf32, #tpu.memory_space<vmem>>, vector<1x8xf32>
      %cst_21 = arith.constant 7.812500e-03 : f32
      %24 = vector.broadcast %cst_21 : f32 to vector<1x8xf32>
      %25 = arith.mulf %23, %24 : vector<1x8xf32>
      %26 = arith.mulf %22, %22 : vector<1x8xf32>
      %27 = arith.subf %25, %26 : vector<1x8xf32>
      %cst_22 = arith.constant 0.000000e+00 : f32
      %28 = vector.broadcast %cst_22 : f32 to vector<1x8xf32>
      %29 = arith.maximumf %27, %28 : vector<1x8xf32>
      %c0_23 = arith.constant 0 : index
      %c0_24 = arith.constant 0 : index
      %30 = vector.load %arg3[%c0_23, %c0_24] : memref<1x8xf32, #tpu.memory_space<vmem>>, vector<1x8xf32>
      tpu.vector_store %arg3[%c0_23, %c0_24], %22 {strides = array<i32>} : memref<1x8xf32, #tpu.memory_space<vmem>>, vector<1x8xf32>,
      %cst_25 = arith.constant 9.99999974E-6 : f32
      %31 = vector.broadcast %cst_25 : f32 to vector<1x8xf32>
      %32 = arith.addf %29, %31 : vector<1x8xf32>
      %33 = math.rsqrt %32 : vector<1x8xf32>
      %c0_26 = arith.constant 0 : index
      %c0_27 = arith.constant 0 : index
      %34 = vector.load %arg4[%c0_26, %c0_27] : memref<1x8xf32, #tpu.memory_space<vmem>>, vector<1x8xf32>
      tpu.vector_store %arg4[%c0_26, %c0_27], %33 {strides = array<i32>} : memref<1x8xf32, #tpu.memory_space<vmem>>, vector<1x8xf32>,
    } else {
    }
    return
  }
  func.func @transform_0(%arg0: i32) -> (i32, i32) {
    %c0_i32 = arith.constant 0 : i32
    %c0_i32_0 = arith.constant 0 : i32
    return %arg0, %c0_i32 : i32, i32
  }
  func.func @transform_1(%arg0: i32) -> (i32, i32) {
    %c0_i32 = arith.constant 0 : i32
    %c0_i32_0 = arith.constant 0 : i32
    %c0_i32_1 = arith.constant 0 : i32
    return %c0_i32, %c0_i32_0 : i32, i32
  }
  func.func @transform_2(%arg0: i32) -> (i32, i32) {
    %c0_i32 = arith.constant 0 : i32
    %c0_i32_0 = arith.constant 0 : i32
    %c0_i32_1 = arith.constant 0 : i32
    return %c0_i32, %c0_i32_0 : i32, i32
  }
  func.func @transform_3(%arg0: i32) -> (i32, i32) {
    %c0_i32 = arith.constant 0 : i32
    %c0_i32_0 = arith.constant 0 : i32
    %c0_i32_1 = arith.constant 0 : i32
    return %c0_i32, %c0_i32_0 : i32, i32
  }
}

</mosaic_0001>

<llo_original>
// kernel: tpu_custom_call.1
$region0: #{tpu_custom_call.1}
  #allocation0 [shape = 'u32[]', space=smem, size = 0x4, offset = 0x4, fixed_abs, tag = 'smem constant byte address 0x4 - core index']
  #allocation1 [shape = 'u32[144,128]{1,0:T(1,128)}', space=vmem, size = 0x12000, scoped, tag = 'internal scratch']
  %s0 = inlined_call_operand.vmem [shape: bf16[128,16], index: 0, kind: input, shape index: {}]
  %s1 = inlined_call_operand.vmem [shape: bf16[16,8], index: 1, kind: input, shape index: {}]
  %s2 = inlined_call_operand.hbm [shape: f32[1,8], index: 2, kind: output, shape index: {0}]
  %s3 = inlined_call_operand.hbm [shape: f32[1,8], index: 3, kind: output, shape index: {1}]
  %4 = xla_tuple %s2, %s3
  %s5 = sld [smem:[#allocation0]]
  $region34: #{tpu_custom_call.1} parent=0
    _
  %s7 = ssub.s32 1, %s5
  %s8 = scalar_select 0, %s7, %s5
  $region1: #{tpu_custom_call.1} parent=0
    #allocation2 [shape = 'u8[512]{0}', space=vmem, size = 0x400, scoped, tag = 'output window, operand 0, single buffered']
    #allocation3 [shape = 's32[1]{0}', space=sflag, size = 0x4, scoped, tag = 'scoped memory for tpu_custom_call.1']
    #allocation4 [shape = 'u8[512]{0}', space=vmem, size = 0x400, scoped, tag = 'output window, operand 1, single buffered']
    #allocation5 [shape = 's32[1]{0}', space=sflag, size = 0x4, scoped, tag = 'scoped memory for tpu_custom_call.1']
    %9 = vsyncpa [#allocation3], 0
    %10 = vsyncpa [#allocation5], 0
    // Predicated region
    $region2: #{tpu_custom_call.1} parent=1 // pred_check
      _
    $region3: #{tpu_custom_call.1} parent=1 // pred_check_branch
      %12 = sbr.rel (0) target = $region5
    $region4: #{tpu_custom_call.1} parent=1 // pred_region
      _
    $region5: #{tpu_custom_call.1} parent=1 // pred_fallthru
      _
    // Predicated region
    $region6: #{tpu_custom_call.1} parent=1 // pred_check
      _
    $region7: #{tpu_custom_call.1} parent=1 // pred_check_branch
      %14 = sbr.rel (0) target = $region9
    $region8: #{tpu_custom_call.1} parent=1 // pred_region
      _
    $region9: #{tpu_custom_call.1} parent=1 // pred_fallthru
      _
    %p16 = scmp.eq.s32.totalorder 0, 0
    // Predicated region
    $region10: #{tpu_custom_call.1} parent=1 // pred_check
      %p17 = pneg %p16
    $region11: #{tpu_custom_call.1} parent=1 // pred_check_branch
      %19 = sbr.rel (%p17) target = $region13
    $region12: #{tpu_custom_call.1} parent=1 // pred_region
      %vm20 = vcmask 57344
      %21 = vst.msk [vmem:[#allocation2] sm:$0x1] %vm20, 0.0
      %22 = vst.msk [vmem:[#allocation4] sm:$0x1] %vm20, 0.0
    $region13: #{tpu_custom_call.1} parent=1 // pred_fallthru
      _
    %v23 = vld [vmem:[%s0] sm:$0xf]
    %v24 = vld [vmem:[%s0 + $0x4] sm:$0xf]
    %v25 = vld [vmem:[%s0 + $0x8] sm:$0xf]
    %v26 = vld [vmem:[%s0 + $0xc] sm:$0xf]
    %v27 = vld [vmem:[%s0 + $0x10] sm:$0xf]
    %v28 = vld [vmem:[%s0 + $0x14] sm:$0xf]
    %v29 = vld [vmem:[%s0 + $0x18] sm:$0xf]
    %v30 = vld [vmem:[%s0 + $0x1c] sm:$0xf]
    %v31 = vld [vmem:[%s0 + $0x20] sm:$0xf]
    %v32 = vld [vmem:[%s0 + $0x24] sm:$0xf]
    %v33 = vld [vmem:[%s0 + $0x28] sm:$0xf]
    %v34 = vld [vmem:[%s0 + $0x2c] sm:$0xf]
    %v35 = vld [vmem:[%s0 + $0x30] sm:$0xf]
    %v36 = vld [vmem:[%s0 + $0x34] sm:$0xf]
    %v37 = vld [vmem:[%s0 + $0x38] sm:$0xf]
    %v38 = vld [vmem:[%s0 + $0x3c] sm:$0xf]
    %v39 = vld [vmem:[%s1] sm:$0xf]
    %v40 = vld [vmem:[%s1 + $0x4] sm:$0xf]
    %v57 = vunpack.c.l.b16 %v23
    %v58 = vunpack.c.l.b16 %v24
    %v59 = vunpack.c.l.b16 %v25
    %v60 = vunpack.c.l.b16 %v26
    %v61 = vunpack.c.l.b16 %v27
    %v62 = vunpack.c.l.b16 %v28
    %v63 = vunpack.c.l.b16 %v29
    %v64 = vunpack.c.l.b16 %v30
    %v65 = vunpack.c.l.b16 %v31
    %v66 = vunpack.c.l.b16 %v32
    %v67 = vunpack.c.l.b16 %v33
    %v68 = vunpack.c.l.b16 %v34
    %v69 = vunpack.c.l.b16 %v35
    %v70 = vunpack.c.l.b16 %v36
    %v71 = vunpack.c.l.b16 %v37
    %v72 = vunpack.c.l.b16 %v38
    %v73 = vpack.c.b16 %v58, %v57
    %v74 = vpack.c.b16 %v60, %v59
    %v75 = vpack.c.b16 %v62, %v61
    %v76 = vpack.c.b16 %v64, %v63
    %v77 = vpack.c.b16 %v66, %v65
    %v78 = vpack.c.b16 %v68, %v67
    %v79 = vpack.c.b16 %v70, %v69
    %v80 = vpack.c.b16 %v72, %v71
    %v83 = vunpack.c.l.b16 %v39
    %v84 = vunpack.c.l.b16 %v40
    %v85 = vpack.c.b16 %v84, %v83
    %vm87 = vcmask 130048
    %v89 = vsel %vm87, %v73, 0
    %v92 = vsel %vm87, %v74, 0
    %v95 = vsel %vm87, %v75, 0
    %v98 = vsel %vm87, %v76, 0
    %v101 = vsel %vm87, %v77, 0
    %v104 = vsel %vm87, %v78, 0
    %v107 = vsel %vm87, %v79, 0
    %v110 = vsel %vm87, %v80, 0
    %112 = vmatprep.subr.bf16.mxu0 0
    %113 = vmatpush1.bf16.msra.mxu0 0
    %114 = vmatprep.subr.bf16.mxu0 0
    %115 = vmatpush1.bf16.msra.mxu0 0
    %116 = vmatprep.subr.bf16.mxu0 0
    %117 = vmatpush1.bf16.msra.mxu0 0
    %118 = vmatprep.subr.bf16.mxu0 0
    %119 = vmatpush1.bf16.msra.mxu0 0
    %120 = vmatprep.subr.bf16.mxu0 0
    %121 = vmatpush1.bf16.msra.mxu0 0
    %122 = vmatprep.subr.bf16.mxu0 0
    %123 = vmatpush1.bf16.msra.mxu0 0
    %124 = vmatprep.subr.bf16.mxu0 0
    %125 = vmatpush1.bf16.msra.mxu0 0
    %126 = vmatprep.subr.bf16.mxu0 0
    %127 = vmatpush1.bf16.msra.mxu0 %v85
    %128 = vmatprep.subr.bf16.mxu0 0
    %129 = vmatpush2.bf16.msra.mxu0 0
    %130 = vmatprep.subr.bf16.mxu0 0
    %131 = vmatpush2.bf16.msra.mxu0 0
    %132 = vmatprep.subr.bf16.mxu0 0
    %133 = vmatpush2.bf16.msra.mxu0 0
    %134 = vmatprep.subr.bf16.mxu0 0
    %135 = vmatpush2.bf16.msra.mxu0 0
    %136 = vmatprep.subr.bf16.mxu0 0
    %137 = vmatpush2.bf16.msra.mxu0 0
    %138 = vmatprep.subr.bf16.mxu0 0
    %139 = vmatpush2.bf16.msra.mxu0 0
    %140 = vmatprep.subr.bf16.mxu0 0
    %141 = vmatpush2.bf16.msra.mxu0 0
    %142 = vmatprep.subr.bf16.mxu0 0
    %143 = vmatpush2.bf16.msra.mxu0 0
    %144 = vmatprep.mubr.bf16.mxu0 0
    %145 = vmatmul.mubr.bf16.gmra.mxu0 %v89
    %v146 = vpop.f32.mrf.mxu0
    %v147 = vadd.f32 0.0, %v146
    %v148 = vpop.f32.mrf.mxu0
    %v149 = vpop.f32.mrf.mxu0
    %v150 = vadd.f32 0.0, %v149
    %v151 = vpop.f32.mrf.mxu0
    %152 = vmatprep.mubr.bf16.mxu0 0
    %153 = vmatmul.mubr.bf16.gmra.mxu0 %v92
    %v154 = vpop.f32.mrf.mxu0
    %v155 = vadd.f32 0.0, %v154
    %v156 = vpop.f32.mrf.mxu0
    %v157 = vpop.f32.mrf.mxu0
    %v158 = vadd.f32 0.0, %v157
    %v159 = vpop.f32.mrf.mxu0
    %160 = vmatprep.mubr.bf16.mxu0 0
    %161 = vmatmul.mubr.bf16.gmra.mxu0 %v95
    %v162 = vpop.f32.mrf.mxu0
    %v163 = vadd.f32 0.0, %v162
    %v164 = vpop.f32.mrf.mxu0
    %v165 = vpop.f32.mrf.mxu0
    %v166 = vadd.f32 0.0, %v165
    %v167 = vpop.f32.mrf.mxu0
    %168 = vmatprep.mubr.bf16.mxu0 0
    %169 = vmatmul.mubr.bf16.gmra.mxu0 %v98
    %v170 = vpop.f32.mrf.mxu0
    %v171 = vadd.f32 0.0, %v170
    %v172 = vpop.f32.mrf.mxu0
    %v173 = vpop.f32.mrf.mxu0
    %v174 = vadd.f32 0.0, %v173
    %v175 = vpop.f32.mrf.mxu0
    %176 = vmatprep.mubr.bf16.mxu0 0
    %177 = vmatmul.mubr.bf16.gmra.mxu0 %v101
    %v178 = vpop.f32.mrf.mxu0
    %v179 = vadd.f32 0.0, %v178
    %v180 = vpop.f32.mrf.mxu0
    %v181 = vpop.f32.mrf.mxu0
    %v182 = vadd.f32 0.0, %v181
    %v183 = vpop.f32.mrf.mxu0
    %184 = vmatprep.mubr.bf16.mxu0 0
    %185 = vmatmul.mubr.bf16.gmra.mxu0 %v104
    %v186 = vpop.f32.mrf.mxu0
    %v187 = vadd.f32 0.0, %v186
    %v188 = vpop.f32.mrf.mxu0
    %v189 = vpop.f32.mrf.mxu0
    %v190 = vadd.f32 0.0, %v189
    %v191 = vpop.f32.mrf.mxu0
    %192 = vmatprep.mubr.bf16.mxu0 0
    %193 = vmatmul.mubr.bf16.gmra.mxu0 %v107
    %v194 = vpop.f32.mrf.mxu0
    %v195 = vadd.f32 0.0, %v194
    %v196 = vpop.f32.mrf.mxu0
    %v197 = vpop.f32.mrf.mxu0
    %v198 = vadd.f32 0.0, %v197
    %v199 = vpop.f32.mrf.mxu0
    %200 = vmatprep.mubr.bf16.mxu0 0
    %201 = vmatmul.mubr.bf16.gmra.mxu0 %v110
    %v202 = vpop.f32.mrf.mxu0
    %v203 = vadd.f32 0.0, %v202
    %v204 = vpop.f32.mrf.mxu0
    %v205 = vpop.f32.mrf.mxu0
    %v206 = vadd.f32 0.0, %v205
    %v207 = vpop.f32.mrf.mxu0
    %208 = vdwg.mxu0
    %v209 = vld [vmem:[#allocation2] sm:$0x1]
    %vm210 = vcmask 64512
    %v211 = vsel %vm210, %v147, 0.0
    %v212 = vsel %vm210, %v150, 0.0
    %v213 = vadd.f32 %v211, %v212
    %v214 = vsel %vm210, %v155, 0.0
    %v215 = vadd.f32 %v213, %v214
    %v216 = vsel %vm210, %v158, 0.0
    %v217 = vadd.f32 %v215, %v216
    %v218 = vsel %vm210, %v163, 0.0
    %v219 = vadd.f32 %v217, %v218
    %v220 = vsel %vm210, %v166, 0.0
    %v221 = vadd.f32 %v219, %v220
    %v222 = vsel %vm210, %v171, 0.0
    %v223 = vadd.f32 %v221, %v222
    %v224 = vsel %vm210, %v174, 0.0
    %v225 = vadd.f32 %v223, %v224
    %v226 = vsel %vm210, %v179, 0.0
    %v227 = vadd.f32 %v225, %v226
    %v228 = vsel %vm210, %v182, 0.0
    %v229 = vadd.f32 %v227, %v228
    %v230 = vsel %vm210, %v187, 0.0
    %v231 = vadd.f32 %v229, %v230
    %v232 = vsel %vm210, %v190, 0.0
    %v233 = vadd.f32 %v231, %v232
    %v234 = vsel %vm210, %v195, 0.0
    %v235 = vadd.f32 %v233, %v234
    %v236 = vsel %vm210, %v198, 0.0
    %v237 = vadd.f32 %v235, %v236
    %v238 = vsel %vm210, %v203, 0.0
    %v239 = vadd.f32 %v237, %v238
    %v240 = vsel %vm210, %v206, 0.0
    %v241 = vadd.f32 %v239, %v240
    %v242 = vrot.slane %v241, 4
    %v243 = vadd.f32 %v241, %v242
    %v244 = vrot.slane %v243, 2
    %v245 = vadd.f32 %v243, %v244
    %v246 = vrot.slane %v245, 1
    %v247 = vadd.f32 %v245, %v246
    %v248 = vadd.f32 %v209, %v247
    %vm249 = vcmask 57344
    %250 = vst.msk [vmem:[#allocation2] sm:$0x1] %vm249, %v248
    %v251 = vld [vmem:[#allocation4] sm:$0x1]
    %v252 = vmul.f32 %v147, %v147
    %v253 = vmul.f32 %v150, %v150
    %v254 = vmul.f32 %v155, %v155
    %v255 = vmul.f32 %v158, %v158
    %v256 = vmul.f32 %v163, %v163
    %v257 = vmul.f32 %v166, %v166
    %v258 = vmul.f32 %v171, %v171
    %v259 = vmul.f32 %v174, %v174
    %v260 = vmul.f32 %v179, %v179
    %v261 = vmul.f32 %v182, %v182
    %v262 = vmul.f32 %v187, %v187
    %v263 = vmul.f32 %v190, %v190
    %v264 = vmul.f32 %v195, %v195
    %v265 = vmul.f32 %v198, %v198
    %v266 = vmul.f32 %v203, %v203
    %v267 = vmul.f32 %v206, %v206
    %v268 = vsel %vm210, %v252, 0.0
    %v269 = vsel %vm210, %v253, 0.0
    %v270 = vadd.f32 %v268, %v269
    %v271 = vsel %vm210, %v254, 0.0
    %v272 = vadd.f32 %v270, %v271
    %v273 = vsel %vm210, %v255, 0.0
    %v274 = vadd.f32 %v272, %v273
    %v275 = vsel %vm210, %v256, 0.0
    %v276 = vadd.f32 %v274, %v275
    %v277 = vsel %vm210, %v257, 0.0
    %v278 = vadd.f32 %v276, %v277
    %v279 = vsel %vm210, %v258, 0.0
    %v280 = vadd.f32 %v278, %v279
    %v281 = vsel %vm210, %v259, 0.0
    %v282 = vadd.f32 %v280, %v281
    %v283 = vsel %vm210, %v260, 0.0
    %v284 = vadd.f32 %v282, %v283
    %v285 = vsel %vm210, %v261, 0.0
    %v286 = vadd.f32 %v284, %v285
    %v287 = vsel %vm210, %v262, 0.0
    %v288 = vadd.f32 %v286, %v287
    %v289 = vsel %vm210, %v263, 0.0
    %v290 = vadd.f32 %v288, %v289
    %v291 = vsel %vm210, %v264, 0.0
    %v292 = vadd.f32 %v290, %v291
    %v293 = vsel %vm210, %v265, 0.0
    %v294 = vadd.f32 %v292, %v293
    %v295 = vsel %vm210, %v266, 0.0
    %v296 = vadd.f32 %v294, %v295
    %v297 = vsel %vm210, %v267, 0.0
    %v298 = vadd.f32 %v296, %v297
    %v299 = vrot.slane %v298, 4
    %v300 = vadd.f32 %v298, %v299
    %v301 = vrot.slane %v300, 2
    %v302 = vadd.f32 %v300, %v301
    %v303 = vrot.slane %v302, 1
    %v304 = vadd.f32 %v302, %v303
    %v305 = vadd.f32 %v251, %v304
    %306 = vst.msk [vmem:[#allocation4] sm:$0x1] %vm249, %v305
    // Predicated region
    $region14: #{tpu_custom_call.1} parent=1 // pred_check
      %p307 = pneg %p16
    $region15: #{tpu_custom_call.1} parent=1 // pred_check_branch
      %309 = sbr.rel (%p307) target = $region17
    $region16: #{tpu_custom_call.1} parent=1 // pred_region
      %v310 = vld [vmem:[#allocation2] sm:$0x1]
      %v311 = vmul.f32 %v310, 0.0078125
      %v312 = vld [vmem:[#allocation4] sm:$0x1]
      %v313 = vmul.f32 %v312, 0.0078125
      %v314 = vmul.f32 %v311, %v311
      %v315 = vsub.f32 %v313, %v314
      %v316 = vmax.f32 %v315, 0.0
      %317 = vst.msk [vmem:[#allocation2] sm:$0x1] %vm249, %v311
      %v318 = vadd.f32 %v316, 1e-05
      %v319 = vrsqrt.pop %v318
      %320 = vst.msk [vmem:[#allocation4] sm:$0x1] %vm249, %v319
    $region17: #{tpu_custom_call.1} parent=1 // pred_fallthru
      _
    // Predicated region
    $region18: #{tpu_custom_call.1} parent=1 // pred_check
      _
    $region19: #{tpu_custom_call.1} parent=1 // pred_check_branch
      %322 = sbr.rel (0) target = $region21
    $region20: #{tpu_custom_call.1} parent=1 // pred_region
      %s324 = ssub.s32 16, 16
      %325 = vsyncadd [#allocation3], %s324
      %s327 = sshll.u32 [#allocation2], 4
      %s328 = int_to_ptr.vmem [resolvable:$true] %s327
      %330 = dma.vmem_to_hbm [thread:$0]  %s328, 16, %s2, [#allocation3]
    $region21: #{tpu_custom_call.1} parent=1 // pred_fallthru
      _
    // Predicated region
    $region22: #{tpu_custom_call.1} parent=1 // pred_check
      _
    $region23: #{tpu_custom_call.1} parent=1 // pred_check_branch
      %332 = sbr.rel (0) target = $region25
    $region24: #{tpu_custom_call.1} parent=1 // pred_region
      %s334 = ssub.s32 16, 16
      %335 = vsyncadd [#allocation5], %s334
      %s337 = sshll.u32 [#allocation4], 4
      %s338 = int_to_ptr.vmem [resolvable:$true] %s337
      %340 = dma.vmem_to_hbm [thread:$0]  %s338, 16, %s3, [#allocation5]
    $region25: #{tpu_custom_call.1} parent=1 // pred_fallthru
      _
    // Predicated region
    $region26: #{tpu_custom_call.1} parent=1 // pred_check
      _
    $region27: #{tpu_custom_call.1} parent=1 // pred_check_branch
      %342 = sbr.rel (0) target = $region29
    $region28: #{tpu_custom_call.1} parent=1 // pred_region
      %343 = dma.done [#allocation3], 16
    $region29: #{tpu_custom_call.1} parent=1 // pred_fallthru
      _
    // Predicated region
    $region30: #{tpu_custom_call.1} parent=1 // pred_check
      _
    $region31: #{tpu_custom_call.1} parent=1 // pred_check_branch
      %345 = sbr.rel (0) target = $region33
    $region32: #{tpu_custom_call.1} parent=1 // pred_region
      %346 = dma.done [#allocation5], 16
    $region33: #{tpu_custom_call.1} parent=1 // pred_fallthru
      _
    %347 = vsyncpa [#allocation3], 1
    %348 = vsyncpa [#allocation5], 1

</llo_original>
